<compile_context>
chip_gen: v7x
topology: tpu7x:2x2x1
jax: 0.10.0
libtpu: 0.0.40
codegen_flags: <defaults>
</compile_context>

<pallas_src>
import functools

import jax
import jax.numpy as jnp
from jax.experimental import pallas as pl
from jax.experimental.pallas import tpu as pltpu


# ----------------------------------------------------------------------------
# VMEM budget / tile selection helpers
# ----------------------------------------------------------------------------
def _vmem_limit_bytes():
    # Generation-aware scoped-VMEM limit: well above the small defaults
    # (16 MiB v5e / 32 MiB v6e,v7x) but with headroom under physical capacity
    # (128 MiB v5e/v6e, 64 MiB per TC on v7x).
    try:
        cap = int(pltpu.get_tpu_info().vmem_capacity_bytes)
    except Exception:  # no info available -> assume the tightest (v7x) budget
        cap = 64 * 1024 * 1024
    return min(int(cap * 0.75), 96 * 1024 * 1024)


def _pick_batch_tile(batch):
    """Largest sublane-friendly divisor of `batch`, preferring >= 2 grid steps
    along the parallel batch axis (megacore sharding on v7x)."""
    cands = [d for d in range(batch, 0, -1)
             if batch % d == 0 and (d % 8 == 0 or d == batch)]
    multi = [d for d in cands if batch // d >= 2]
    return multi[0] if multi else cands[0]


def _choose_mean_pool_tiles(B, S, H, h_itemsize, out_itemsize, budget_bytes):
    """Pick (batch_tile, seq_tile) so double-buffered blocks + scratch fit the
    VMEM budget, keeping the batch axis multi-step and output stores lane-dense."""
    tb_cands = [d for d in range(B, 0, -1)
                if B % d == 0 and (d % 8 == 0 or d == B)]
    multi = [d for d in tb_cands if B // d >= 2]
    tb_cands = multi + [d for d in tb_cands if d not in multi]
    ts_cands = [d for d in range(S, 0, -1)
                if S % d == 0 and (d % 8 == 0 or d == S)]

    def block_bytes(tb, ts):
        b = 2 * tb * ts * H * h_itemsize      # double-buffered hidden-state blocks
        b += 2 * tb * ts * 4                  # double-buffered int32 mask blocks
        b += 2 * tb * H * out_itemsize        # double-buffered output blocks
        b += tb * H * 4 + tb * 128 * 4        # f32 accumulator + (padded) count scratch
        return b

    for tb in tb_cands:
        for ts in ts_cands:
            if block_bytes(tb, ts) <= budget_bytes:
                return tb, ts
    return tb_cands[-1], ts_cands[-1]


# ----------------------------------------------------------------------------
# Kernel 1: LayerNorm over the hidden axis (torch.nn.LayerNorm semantics:
# biased variance, eps inside rsqrt, f32 accumulation). Single fused pass over
# x: sum(x) and sum(x*x) -> one fewer cross-lane reduction per tile.
# ----------------------------------------------------------------------------
def _layer_norm_kernel(x_ref, gamma_ref, beta_ref, o_ref, *, eps):
    x = x_ref[...].astype(jnp.float32)                  # (tb, H)
    inv_n = 1.0 / x.shape[-1]
    s1 = jnp.sum(x, axis=-1, keepdims=True)             # (tb, 1)
    s2 = jnp.sum(x * x, axis=-1, keepdims=True)         # (tb, 1)
    mean = s1 * inv_n
    var = s2 * inv_n - mean * mean                      # biased variance
    inv = jax.lax.rsqrt(var + eps)
    y = (x - mean) * inv
    y = y * gamma_ref[...].astype(jnp.float32) + beta_ref[...].astype(jnp.float32)
    o_ref[...] = y.astype(o_ref.dtype)


def layer_norm_pallas(x, gamma, beta, *, eps=1e-5, feature_dim=None):
    """LayerNorm of the first `feature_dim` columns of each row of `x`.

    x: (B, W) with W == feature_dim (plain cls input), or W == S*H for the
    fused CLS-extraction path, where x is a row-major (B, S, H) hidden-state
    tensor flattened to (B, S*H): columns [0:H) of each row are exactly the
    CLS token, so the kernel DMAs only B*H elements from HBM.
    """
    B, W = x.shape
    H = feature_dim if feature_dim is not None else W
    assert W == H or H % 128 == 0, "fused CLS path needs H to be a multiple of 128"

    tb = _pick_batch_tile(B)
    gamma2 = gamma.reshape(1, H).astype(jnp.float32)
    beta2 = beta.reshape(1, H).astype(jnp.float32)
    vmem_limit = _vmem_limit_bytes()

    return pl.pallas_call(
        functools.partial(_layer_norm_kernel, eps=eps),
        out_shape=jax.ShapeDtypeStruct((B, H), x.dtype),
        grid_spec=pltpu.PrefetchScalarGridSpec(
            num_scalar_prefetch=0,
            grid=(B // tb,),
            in_specs=[
                pl.BlockSpec((tb, H), lambda i: (i, 0)),   # only the CLS columns
                pl.BlockSpec((1, H), lambda i: (0, 0)),
                pl.BlockSpec((1, H), lambda i: (0, 0)),
            ],
            out_specs=pl.BlockSpec((tb, H), lambda i: (i, 0)),
        ),
        compiler_params=pltpu.CompilerParams(
            dimension_semantics=("parallel",),
            vmem_limit_bytes=vmem_limit,
        ),
    )(x, gamma2, beta2)


# ----------------------------------------------------------------------------
# Kernel 2: masked mean pooling over the sequence axis.
#   sentence_emb = sum_s(mask[b,s] * h[b,s,:]) / sum_s(mask[b,s])
# Grid = (batch tiles [parallel], seq tiles [arbitrary]); an f32 accumulator in
# VMEM carries partial sums across the seq axis; init on seq_id==0 and
# normalize/store on the last seq step.
# ----------------------------------------------------------------------------
def _mean_pool_kernel(h_ref, mask_ref, o_ref, acc_ref, cnt_ref):
    j = pl.program_id(1)

    @pl.when(j == 0)
    def _():
        acc_ref[...] = jnp.zeros_like(acc_ref)
        cnt_ref[...] = jnp.zeros_like(cnt_ref)

    h = h_ref[...].astype(jnp.float32)            # (tb, ts, H)
    m = mask_ref[...].astype(jnp.float32)         # (tb, ts, 1) - lane-broadcast over H
    acc_ref[...] += jnp.sum(h * m, axis=1)        # (tb, H)
    cnt_ref[...] += jnp.sum(m, axis=1)            # (tb, 1)

    @pl.when(j == pl.num_programs(1) - 1)
    def _():
        # Clamp the denominator (HF-style) so a fully-masked row yields 0, not NaN.
        denom = jnp.maximum(cnt_ref[...], 1e-9)
        o_ref[...] = (acc_ref[...] * pl.reciprocal(denom)).astype(o_ref.dtype)


def mean_pooling_pallas(last_hidden_state, attention_mask):
    B, S, H = last_hidden_state.shape
    h_itemsize = jnp.dtype(last_hidden_state.dtype).itemsize

    # Keep the mask in an integer/32-bit dtype at the HBM boundary; cast to f32
    # inside the kernel (free VPU work hidden under DMA).
    if attention_mask.dtype not in (jnp.int32, jnp.uint32, jnp.float32):
        attention_mask = attention_mask.astype(jnp.int32)
    mask3 = attention_mask.reshape(B, S, 1)       # metadata reshape, no HBM copy

    vmem_limit = _vmem_limit_bytes()
    tb, ts = _choose_mean_pool_tiles(
        B, S, H, h_itemsize, h_itemsize, budget_bytes=int(vmem_limit * 0.85))

    return pl.pallas_call(
        _mean_pool_kernel,
        out_shape=jax.ShapeDtypeStruct((B, H), last_hidden_state.dtype),
        grid_spec=pltpu.PrefetchScalarGridSpec(
            num_scalar_prefetch=0,
            grid=(B // tb, S // ts),              # seq (reduction) axis last
            in_specs=[
                pl.BlockSpec((tb, ts, H), lambda i, j: (i, j, 0)),
                pl.BlockSpec((tb, ts, 1), lambda i, j: (i, j, 0)),
            ],
            out_specs=pl.BlockSpec((tb, H), lambda i, j: (i, 0)),
            scratch_shapes=[
                pltpu.VMEM((tb, H), jnp.float32),   # running weighted sum
                pltpu.VMEM((tb, 1), jnp.float32),   # running mask count
            ],
        ),
        compiler_params=pltpu.CompilerParams(
            dimension_semantics=("parallel", "arbitrary"),
            vmem_limit_bytes=vmem_limit,
        ),
    )(last_hidden_state, mask3)


# ----------------------------------------------------------------------------
# NaiveItemTower forward (JAX/Pallas version)
# ----------------------------------------------------------------------------
class NaiveItemTowerPallas:
    def __init__(self, hidden, key):
        k1, k2 = jax.random.split(key)
        # torch.nn.LayerNorm default init is gamma=1, beta=0; perturb
        # deterministically so the affine terms are exercised.
        self.gamma = 1.0 + 0.1 * jax.random.normal(k1, (hidden,), jnp.float32)
        self.beta = 0.01 * jax.random.normal(k2, (hidden,), jnp.float32)
        self.eps = 1e-5

    def forward(self, cls=None, last_hidden_state=None, attention_mask=None,
                input_step="inputs", output_step="cls"):
        if input_step == "inputs":
            assert last_hidden_state is not None
            B, S, H = last_hidden_state.shape
            if output_step in ("cls", "mu", "mean"):
                return last_hidden_state[:, 0]
            if output_step == "mean_layer_norm":
                if H % 128 == 0:
                    # Fused CLS extraction: flatten (B,S,H) -> (B,S*H); the first H
                    # columns of each row are the CLS token, so the kernel reads only
                    # B*H elements and `cls` is never materialized in HBM.
                    flat = last_hidden_state.reshape(B, S * H)
                    return layer_norm_pallas(flat, self.gamma, self.beta,
                                             eps=self.eps, feature_dim=H)
                cls = last_hidden_state[:, 0]
                return layer_norm_pallas(cls, self.gamma, self.beta,
                                         eps=self.eps, feature_dim=H)
            if output_step == "mean_pooling":
                assert attention_mask is not None
                return mean_pooling_pallas(last_hidden_state, attention_mask)
        else:  # input_step == 'cls'
            assert cls is not None
            if output_step in ("cls", "mu", "mean"):
                return cls
            if output_step == "mean_layer_norm":
                return layer_norm_pallas(cls, self.gamma, self.beta,
                                         eps=self.eps, feature_dim=cls.shape[-1])
            assert output_step != "mean_pooling", "cannot create mean pooling from cls"
        raise NotImplementedError(f"{input_step}->{output_step}")


# ----------------------------------------------------------------------------
# Pure-JAX references for verification
# ----------------------------------------------------------------------------
def _ref_layer_norm(x, gamma, beta, eps=1e-5):
    x = x.astype(jnp.float32)
    mean = jnp.mean(x, axis=-1, keepdims=True)
    var = jnp.mean((x - mean) ** 2, axis=-1, keepdims=True)
    return (x - mean) * jax.lax.rsqrt(var + eps) * gamma + beta


def _ref_mean_pooling(h, mask):
    m = mask.astype(jnp.float32)
    return (jnp.sum(h.astype(jnp.float32) * m[..., None], axis=1)
            / jnp.sum(m, axis=1, keepdims=True)).astype(h.dtype)


if __name__ == "__main__":
    B, S, H = 16, 16, 128   # small, TPU-tile-friendly shapes
    key = jax.random.PRNGKey(0)
    k_h, k_tower = jax.random.split(key)

    last_hidden_state = jax.random.normal(k_h, (B, S, H), jnp.float32)
    # deterministic variable-length attention mask (0/1 ints, like HF tokenizers)
    lengths = (jnp.arange(B) % (S - 3)) + 4                      # in [4, S]
    attention_mask = (jnp.arange(S)[None, :] < lengths[:, None]).astype(jnp.int32)

    tower = NaiveItemTowerPallas(H, k_tower)

    # 1) cls passthrough
    out_cls = tower.forward(last_hidden_state=last_hidden_state,
                            input_step="inputs", output_step="cls")
    # 2) mean_layer_norm path (fused CLS extraction + Pallas LayerNorm kernel)
    out_ln = tower.forward(last_hidden_state=last_hidden_state,
                           input_step="inputs", output_step="mean_layer_norm")
    # 3) mean_layer_norm from a pre-computed cls (non-fused path)
    cls_in = last_hidden_state[:, 0]
    out_ln_cls = tower.forward(cls=cls_in, input_step="cls",
                               output_step="mean_layer_norm")
    # 4) mean_pooling path (tiled, accumulated masked mean-pool kernel)
    out_mp = tower.forward(last_hidden_state=last_hidden_state,
                           attention_mask=attention_mask,
                           input_step="inputs", output_step="mean_pooling")

    jax.block_until_ready((out_cls, out_ln, out_ln_cls, out_mp))

    cls = last_hidden_state[:, 0]
    ref_ln = _ref_layer_norm(cls, tower.gamma, tower.beta)
    assert jnp.allclose(out_cls, cls)
    assert jnp.allclose(out_ln, ref_ln, atol=2e-5, rtol=2e-5)
    assert jnp.allclose(out_ln_cls, ref_ln, atol=2e-5, rtol=2e-5)
    assert jnp.allclose(out_mp, _ref_mean_pooling(last_hidden_state, attention_mask),
                        atol=1e-5, rtol=1e-5)

    print("KERNEL_OK")
</pallas_src>

<mosaic_0001>
module attributes {stable_mosaic.version = 11 : i64} {
  func.func @_layer_norm_kernel(%arg0: i32, %arg1: memref<8x128xf32, #tpu.memory_space<vmem>>, %arg2: memref<1x128xf32, #tpu.memory_space<vmem>>, %arg3: memref<1x128xf32, #tpu.memory_space<vmem>>, %arg4: memref<8x128xf32, #tpu.memory_space<vmem>>) attributes {dimension_semantics = [#tpu.dimension_semantics<parallel>], iteration_bounds = array<i64: 2>, scalar_prefetch = 0 : i64, scratch_operands = 0 : i64, tpu.core_type = #tpu.core_type<tc>, window_params = [{transform_indices = @transform_0, window_bounds = array<i64: 8, 128>}, {pipeline_mode = #tpu.pipeline_mode<synchronous>, transform_indices = @transform_1, window_bounds = array<i64: 1, 128>}, {pipeline_mode = #tpu.pipeline_mode<synchronous>, transform_indices = @transform_2, window_bounds = array<i64: 1, 128>}, {transform_indices = @transform_3, window_bounds = array<i64: 8, 128>}]} {
    %c0 = arith.constant 0 : index
    %c0_0 = arith.constant 0 : index
    %0 = vector.load %arg1[%c0, %c0_0] : memref<8x128xf32, #tpu.memory_space<vmem>>, vector<8x128xf32>
    %cst = arith.constant dense<0.000000e+00> : vector<8xf32>
    %1 = vector.multi_reduction <add>, %0, %cst [1] : vector<8x128xf32> to vector<8xf32>
    %2 = vector.shape_cast %1 : vector<8xf32> to vector<8x1xf32>
    %3 = arith.mulf %0, %0 : vector<8x128xf32>
    %cst_1 = arith.constant dense<0.000000e+00> : vector<8xf32>
    %4 = vector.multi_reduction <add>, %3, %cst_1 [1] : vector<8x128xf32> to vector<8xf32>
    %5 = vector.shape_cast %4 : vector<8xf32> to vector<8x1xf32>
    %cst_2 = arith.constant 7.812500e-03 : f32
    %6 = vector.broadcast %cst_2 : f32 to vector<8x1xf32>
    %7 = arith.mulf %2, %6 : vector<8x1xf32>
    %cst_3 = arith.constant 7.812500e-03 : f32
    %8 = vector.broadcast %cst_3 : f32 to vector<8x1xf32>
    %9 = arith.mulf %5, %8 : vector<8x1xf32>
    %10 = arith.mulf %7, %7 : vector<8x1xf32>
    %11 = arith.subf %9, %10 : vector<8x1xf32>
    %cst_4 = arith.constant 9.99999974E-6 : f32
    %12 = vector.broadcast %cst_4 : f32 to vector<8x1xf32>
    %13 = arith.addf %11, %12 : vector<8x1xf32>
    %14 = math.rsqrt %13 : vector<8x1xf32>
    %15 = vector.broadcast %7 : vector<8x1xf32> to vector<8x128xf32>
    %16 = arith.subf %0, %15 : vector<8x128xf32>
    %17 = vector.broadcast %14 : vector<8x1xf32> to vector<8x128xf32>
    %18 = arith.mulf %16, %17 : vector<8x128xf32>
    %c0_5 = arith.constant 0 : index
    %c0_6 = arith.constant 0 : index
    %19 = vector.load %arg2[%c0_5, %c0_6] : memref<1x128xf32, #tpu.memory_space<vmem>>, vector<1x128xf32>
    %20 = vector.broadcast %19 : vector<1x128xf32> to vector<8x128xf32>
    %21 = arith.mulf %18, %20 : vector<8x128xf32>
    %c0_7 = arith.constant 0 : index
    %c0_8 = arith.constant 0 : index
    %22 = vector.load %arg3[%c0_7, %c0_8] : memref<1x128xf32, #tpu.memory_space<vmem>>, vector<1x128xf32>
    %23 = vector.broadcast %22 : vector<1x128xf32> to vector<8x128xf32>
    %24 = arith.addf %21, %23 : vector<8x128xf32>
    %c0_9 = arith.constant 0 : index
    %c0_10 = arith.constant 0 : index
    %25 = vector.load %arg4[%c0_9, %c0_10] : memref<8x128xf32, #tpu.memory_space<vmem>>, vector<8x128xf32>
    tpu.vector_store %arg4[%c0_9, %c0_10], %24 {strides = array<i32>} : memref<8x128xf32, #tpu.memory_space<vmem>>, vector<8x128xf32>,
    return
  }
  func.func @transform_0(%arg0: i32) -> (i32, i32) {
    %c0_i32 = arith.constant 0 : i32
    %c0_i32_0 = arith.constant 0 : i32
    return %arg0, %c0_i32 : i32, i32
  }
  func.func @transform_1(%arg0: i32) -> (i32, i32) {
    %c0_i32 = arith.constant 0 : i32
    %c0_i32_0 = arith.constant 0 : i32
    %c0_i32_1 = arith.constant 0 : i32
    return %c0_i32, %c0_i32_0 : i32, i32
  }
  func.func @transform_2(%arg0: i32) -> (i32, i32) {
    %c0_i32 = arith.constant 0 : i32
    %c0_i32_0 = arith.constant 0 : i32
    %c0_i32_1 = arith.constant 0 : i32
    return %c0_i32, %c0_i32_0 : i32, i32
  }
  func.func @transform_3(%arg0: i32) -> (i32, i32) {
    %c0_i32 = arith.constant 0 : i32
    %c0_i32_0 = arith.constant 0 : i32
    return %arg0, %c0_i32 : i32, i32
  }
}

</mosaic_0001>

<llo_original>
// kernel: tpu_custom_call.1
$region0: #{tpu_custom_call.1}
  #allocation0 [shape = 'u32[]', space=smem, size = 0x4, offset = 0x4, fixed_abs, tag = 'smem constant byte address 0x4 - core index']
  #allocation1 [shape = 'u32[144,128]{1,0:T(1,128)}', space=vmem, size = 0x12000, scoped, tag = 'internal scratch']
  %s0 = inlined_call_operand.hbm [shape: f32[16,2048], index: 0, kind: input, shape index: {}]
  %s1 = inlined_call_operand.vmem [shape: f32[1,128], index: 1, kind: input, shape index: {}]
  %s2 = inlined_call_operand.vmem [shape: f32[1,128], index: 2, kind: input, shape index: {}]
  %s3 = inlined_call_operand.hbm [shape: f32[16,128], index: 3, kind: output, shape index: {}]
  %s4 = sld [smem:[#allocation0]]
  $region49: #{tpu_custom_call.1} parent=0
    _
  %s6 = ssub.s32 1, %s4
  %s7 = scalar_select 0, %s6, %s4
  $region1: #{tpu_custom_call.1} parent=0
    #allocation2 [shape = 'u8[8192]{0}', space=vmem, size = 0x2000, scoped, tag = 'input window, operand 0']
    #allocation3 [shape = 's32[2]{0}', space=sflag, size = 0x8, scoped, tag = 'scoped memory for tpu_custom_call.1']
    #allocation4 [shape = 's32[2]{0}', space=sflag, size = 0x8, scoped, tag = 'scoped memory for tpu_custom_call.1']
    #allocation5 [shape = 'u8[8192]{0}', space=vmem, size = 0x2000, scoped, tag = 'output window, operand 0']
    %8 = vsyncpa [#allocation3], 0
    %s9 = scalar_lea.sflag [#allocation3], 1
    %10 = vsyncpa %s9, 0
    %11 = vsyncpa [#allocation4], 0
    %s12 = scalar_lea.sflag [#allocation4], 1
    %13 = vsyncpa %s12, 0
    loop: start=0, step=1, limit=4
    $region2: #{tpu_custom_call.1} parent=1 // loop_pre_header
      _
    $region3: #{tpu_custom_call.1} parent=1 // loop_header
      %s15 = sphi 0, %s19
      %p16 = scmp.ge.s32.totalorder %s15, 4
      %s25 = sphi 0, %s27
      %s28 = sphi 0, %s25
      %s29 = sphi 0, %s28
      %s45 = sphi 0, %s29
      %s49 = sphi 0, %s49
      %s51 = sphi 0, %s49
      %s52 = sphi 0, %s51
      %s66 = sphi 0, %s52
      %s70 = sphi 0, %s70
      %s72 = sphi 0, %s70
      %s73 = sphi 0, %s72
      %s87 = sphi 0, %s73
      %s93 = sphi 0, %s95
      %s96 = sphi 0, %s93
      %s97 = sphi 0, %s96
      %s113 = sphi 0, %s97
    $region4: #{tpu_custom_call.1} parent=1 // loop_header_branch
      %18 = sbr.rel (%p16) target = $region8
    $region5: #{tpu_custom_call.1} parent=1 // loop_body
      %s20 = ssub.s32 %s15, 1
      %s21 = ssub.s32 %s15, 2
      %s22 = sadd.s32 %s15, 1
      %s23 = ssub.s32 %s15, %s22
      %p24 = scmp.eq.s32.totalorder %s23, 0
      %s26 = sadd.s32 %s25, 1
      %s27 = scalar_select %p24, %s25, %s26
      %p30 = pneg %p24
      %p31 = scmp.eq.s32.totalorder %s15, 1
      %p32 = por %p30, %p31
      %p33 = scmp.ne.s32.totalorder %s25, %s28
      %p34 = scmp.eq.s32.totalorder %s15, 0
      %p35 = por %p33, %p34
      %p36 = scmp.ne.s32.totalorder %s25, %s28
      %p37 = scmp.eq.s32.totalorder %s20, 1
      %p38 = por %p36, %p37
      %p39 = scmp.ne.s32.totalorder %s28, %s29
      %p40 = scmp.eq.s32.totalorder %s20, 0
      %p41 = por %p39, %p40
      %p42 = scmp.ne.s32.totalorder %s28, %s29
      %p43 = scmp.eq.s32.totalorder %s21, 1
      %p44 = por %p42, %p43
      %p46 = scmp.ne.s32.totalorder %s29, %s45
      %p47 = scmp.eq.s32.totalorder %s21, 0
      %p48 = por %p46, %p47
      %s50 = sadd.s32 %s49, 1
      %p53 = scmp.eq.s32.totalorder %s15, 1
      %p54 = scmp.ne.s32.totalorder %s49, %s51
      %p55 = scmp.eq.s32.totalorder %s15, 0
      %p56 = por %p54, %p55
      %p57 = scmp.ne.s32.totalorder %s49, %s51
      %p58 = scmp.eq.s32.totalorder %s20, 1
      %p59 = por %p57, %p58
      %p60 = scmp.ne.s32.totalorder %s51, %s52
      %p61 = scmp.eq.s32.totalorder %s20, 0
      %p62 = por %p60, %p61
      %p63 = scmp.ne.s32.totalorder %s51, %s52
      %p64 = scmp.eq.s32.totalorder %s21, 1
      %p65 = por %p63, %p64
      %p67 = scmp.ne.s32.totalorder %s52, %s66
      %p68 = scmp.eq.s32.totalorder %s21, 0
      %p69 = por %p67, %p68
      %s71 = sadd.s32 %s70, 1
      %p74 = scmp.eq.s32.totalorder %s15, 1
      %p75 = scmp.ne.s32.totalorder %s70, %s72
      %p76 = scmp.eq.s32.totalorder %s15, 0
      %p77 = por %p75, %p76
      %p78 = scmp.ne.s32.totalorder %s70, %s72
      %p79 = scmp.eq.s32.totalorder %s20, 1
      %p80 = por %p78, %p79
      %p81 = scmp.ne.s32.totalorder %s72, %s73
      %p82 = scmp.eq.s32.totalorder %s20, 0
      %p83 = por %p81, %p82
      %p84 = scmp.ne.s32.totalorder %s72, %s73
      %p85 = scmp.eq.s32.totalorder %s21, 1
      %p86 = por %p84, %p85
      %p88 = scmp.ne.s32.totalorder %s73, %s87
      %p89 = scmp.eq.s32.totalorder %s21, 0
      %p90 = por %p88, %p89
      %s91 = ssub.s32 %s15, %s22
      %p92 = scmp.eq.s32.totalorder %s91, 0
      %s94 = sadd.s32 %s93, 1
      %s95 = scalar_select %p92, %s93, %s94
      %p98 = pneg %p92
      %p99 = scmp.eq.s32.totalorder %s15, 1
      %p100 = por %p98, %p99
      %p101 = scmp.ne.s32.totalorder %s93, %s96
      %p102 = scmp.eq.s32.totalorder %s15, 0
      %p103 = por %p101, %p102
      %p104 = scmp.ne.s32.totalorder %s93, %s96
      %p105 = scmp.eq.s32.totalorder %s20, 1
      %p106 = por %p104, %p105
      %p107 = scmp.ne.s32.totalorder %s96, %s97
      %p108 = scmp.eq.s32.totalorder %s20, 0
      %p109 = por %p107, %p108
      %p110 = scmp.ne.s32.totalorder %s96, %s97
      %p111 = scmp.eq.s32.totalorder %s21, 1
      %p112 = por %p110, %p111
      %p114 = scmp.ne.s32.totalorder %s97, %s113
      %p115 = scmp.eq.s32.totalorder %s21, 0
      %p116 = por %p114, %p115
      %p117 = scmp.le.s32.totalorder 1, %s15
      %p118 = scmp.lt.s32.totalorder %s15, 3
      %p119 = pnand %p117, %p118
      %p120 = pneg %p119
      // Predicated region
      $region9: #{tpu_custom_call.1} parent=5 // pred_check
        _
      $region10: #{tpu_custom_call.1} parent=5 // pred_check_branch
        %122 = sbr.rel (%p119) target = $region12
      $region11: #{tpu_custom_call.1} parent=5 // pred_region
        %s123 = ssub.s32 %s15, 1
        // Predicated region
        $region13: #{tpu_custom_call.1} parent=11 // pred_check
          %p124 = pneg %p62
        $region14: #{tpu_custom_call.1} parent=11 // pred_check_branch
          %126 = sbr.rel (%p124) target = $region16
        $region15: #{tpu_custom_call.1} parent=11 // pred_region
          _
        $region16: #{tpu_custom_call.1} parent=11 // pred_fallthru
          _
        // Predicated region
        $region17: #{tpu_custom_call.1} parent=11 // pred_check
          %p127 = pneg %p83
        $region18: #{tpu_custom_call.1} parent=11 // pred_check_branch
          %129 = sbr.rel (%p127) target = $region20
        $region19: #{tpu_custom_call.1} parent=11 // pred_region
          _
        $region20: #{tpu_custom_call.1} parent=11 // pred_fallthru
          _
      $region12: #{tpu_custom_call.1} parent=5 // pred_fallthru
        _
      %p130 = scmp.lt.s32.totalorder %s15, 2
      // Predicated region
      $region21: #{tpu_custom_call.1} parent=5 // pred_check
        %p131 = pneg %p130
      $region22: #{tpu_custom_call.1} parent=5 // pred_check_branch
        %133 = sbr.rel (%p131) target = $region24
      $region23: #{tpu_custom_call.1} parent=5 // pred_region
        // Predicated region
        $region25: #{tpu_custom_call.1} parent=23 // pred_check
          %p134 = pneg %p35
        $region26: #{tpu_custom_call.1} parent=23 // pred_check_branch
          %136 = sbr.rel (%p134) target = $region28
        $region27: #{tpu_custom_call.1} parent=23 // pred_region
          %s137 = sand.u32 %s25, 1
          %s138 = scalar_lea.sflag [#allocation3], %s137
          %s139 = sand.u32 %s25, 1
          %s140 = smul.addr %s139, 8
          %s141 = scalar_lea.vmem [#allocation2], %s140
          %s143 = ssub.s32 128, 128
          %144 = vsyncadd %s138, %s143
          %s145 = smul.addr %s15, 16
          %s146 = smul.addr %s145, 128
          %s147 = scalar_lea.hbm %s0, %s146
          %s149 = sshll.u32 %s141, 4
          %s150 = int_to_ptr.vmem [resolvable:$true] %s149
          %152 = dma.hbm_to_vmem [thread:$0]  %s147, 128, %s150, %s138
        $region28: #{tpu_custom_call.1} parent=23 // pred_fallthru
          _
      $region24: #{tpu_custom_call.1} parent=5 // pred_fallthru
        _
      %p153 = scmp.le.s32.totalorder 1, %s15
      %p154 = scmp.lt.s32.totalorder %s15, 3
      %p155 = pnand %p153, %p154
      %p156 = pneg %p155
      // Predicated region
      $region29: #{tpu_custom_call.1} parent=5 // pred_check
        _
      $region30: #{tpu_custom_call.1} parent=5 // pred_check_branch
        %158 = sbr.rel (%p155) target = $region32
      $region31: #{tpu_custom_call.1} parent=5 // pred_region
        %s159 = ssub.s32 %s15, 1
        %s160 = sand.u32 %s28, 1
        %s161 = scalar_lea.sflag [#allocation3], %s160
        %s162 = sand.u32 %s28, 1
        %s163 = smul.addr %s162, 8
        %s164 = scalar_lea.vmem [#allocation2], %s163
        // Predicated region
        $region33: #{tpu_custom_call.1} parent=31 // pred_check
          %p165 = pneg %p41
        $region34: #{tpu_custom_call.1} parent=31 // pred_check_branch
          %167 = sbr.rel (%p165) target = $region36
        $region35: #{tpu_custom_call.1} parent=31 // pred_region
          %168 = dma.done %s161, 128
        $region36: #{tpu_custom_call.1} parent=31 // pred_fallthru
          _
        %s169 = sand.u32 %s28, 1
        %s170 = scalar_lea.sflag [#allocation3], %s169
        %s171 = sand.u32 %s28, 1
        %s172 = smul.addr %s171, 8
        %s173 = scalar_lea.vmem [#allocation2], %s172
        %p174 = pneg %p41
        %p175 = pneg %p38
        %p176 = pneg %p62
        %p177 = pneg %p59
        %p178 = pneg %p83
        %p179 = pneg %p80
        %p180 = pneg %p109
        %p181 = pneg %p106
        %s182 = sand.u32 %s96, 1
        %s183 = scalar_lea.sflag [#allocation4], %s182
        %s184 = sand.u32 %s96, 1
        %s185 = smul.addr %s184, 8
        %s186 = scalar_lea.vmem [#allocation5], %s185
        %v187 = vld [vmem:[%s164] sm:$0xff]
        %188 = vadd.xlane.f32.xlu0 %v187
        %v189 = vpop.xlane.xlu0 %188
        %v190 = vmul.f32 %v187, %v187
        %191 = vadd.xlane.f32.xlu0 %v190
        %v192 = vpop.xlane.xlu0 %191
        %v193 = vmul.f32 %v189, 0.0078125
        %v194 = vmul.f32 %v192, 0.0078125
        %v195 = vmul.f32 %v193, %v193
        %v196 = vsub.f32 %v194, %v195
        %v197 = vadd.f32 %v196, 1e-05
        %v198 = vrsqrt.pop %v197
        %v199 = vsub.f32 %v187, %v193
        %v200 = vmul.f32 %v199, %v198
        %v201 = vld [vmem:[%s1] sm:$0x1]
        %v203 = vlaneseq
        %v204 = vshrl.u32 %v203, 7
        %v205 = vsub.s32 0, %v204
        %v206 = vrot.slane %v201, %v205
        %v208 = vmul.f32 %v200, %v206
        %v209 = vld [vmem:[%s2] sm:$0x1]
        %v211 = vlaneseq
        %v212 = vshrl.u32 %v211, 7
        %v213 = vsub.s32 0, %v212
        %v214 = vrot.slane %v209, %v213
        %v216 = vadd.f32 %v208, %v214
        %217 = vst [vmem:[%s186] sm:$0xff] %v216
        %s218 = sand.u32 %s96, 1
        %s219 = scalar_lea.sflag [#allocation4], %s218
        %s220 = sand.u32 %s96, 1
        %s221 = smul.addr %s220, 8
        %s222 = scalar_lea.vmem [#allocation5], %s221
        // Predicated region
        $region37: #{tpu_custom_call.1} parent=31 // pred_check
          %p223 = pneg %p106
        $region38: #{tpu_custom_call.1} parent=31 // pred_check_branch
          %225 = sbr.rel (%p223) target = $region40
        $region39: #{tpu_custom_call.1} parent=31 // pred_region
          %s227 = ssub.s32 128, 128
          %228 = vsyncadd %s219, %s227
          %s229 = smul.addr %s20, 128
          %s230 = scalar_lea.hbm %s3, %s229
          %s232 = sshll.u32 %s222, 4
          %s233 = int_to_ptr.vmem [resolvable:$true] %s232
          %235 = dma.vmem_to_hbm [thread:$0]  %s233, 128, %s230, %s219
        $region40: #{tpu_custom_call.1} parent=31 // pred_fallthru
          _
      $region32: #{tpu_custom_call.1} parent=5 // pred_fallthru
        _
      %p236 = scmp.le.s32.totalorder 2, %s15
      // Predicated region
      $region41: #{tpu_custom_call.1} parent=5 // pred_check
        %p237 = pneg %p236
      $region42: #{tpu_custom_call.1} parent=5 // pred_check_branch
        %239 = sbr.rel (%p237) target = $region44
      $region43: #{tpu_custom_call.1} parent=5 // pred_region
        %s240 = ssub.s32 %s15, 2
        // Predicated region
        $region45: #{tpu_custom_call.1} parent=43 // pred_check
          %p241 = pneg %p112
        $region46: #{tpu_custom_call.1} parent=43 // pred_check_branch
          %243 = sbr.rel (%p241) target = $region48
        $region47: #{tpu_custom_call.1} parent=43 // pred_region
          %s244 = sand.u32 %s97, 1
          %s245 = scalar_lea.sflag [#allocation4], %s244
          %s246 = sand.u32 %s97, 1
          %s247 = smul.addr %s246, 8
          %s248 = scalar_lea.vmem [#allocation5], %s247
          %249 = dma.done %s245, 128
        $region48: #{tpu_custom_call.1} parent=43 // pred_fallthru
          _
      $region44: #{tpu_custom_call.1} parent=5 // pred_fallthru
        _
    $region6: #{tpu_custom_call.1} parent=1 // loop_footer
      %s19 = sadd.s32 1, %s15
    $region7: #{tpu_custom_call.1} parent=1 // loop_footer_branch
      %14 = sbr.rel target = $region3
    $region8: #{tpu_custom_call.1} parent=1 // loop_exit
      _
    %250 = vsyncpa [#allocation3], 1
    %s251 = scalar_lea.sflag [#allocation3], 1
    %252 = vsyncpa %s251, 1
    %253 = vsyncpa [#allocation4], 1
    %s254 = scalar_lea.sflag [#allocation4], 1
    %255 = vsyncpa %s254, 1

</llo_original>
